<compile_context>
chip_gen: v7x
topology: tpu7x:2x2x1
jax: 0.10.0
libtpu: 0.0.40
codegen_flags: <defaults>
</compile_context>

<pallas_src>
import jax
import jax.numpy as jnp
from jax.experimental import pallas as pl
from jax.experimental.pallas import tpu as pltpu


def _attn_pool_kernel(x_ref, w_ref, o_ref, m_sc, l_sc, acc_sc):
    # x_ref:  (tb, ts, D)  input rows, native dtype
    # w_ref:  (1, 1, D)    score weights (f32), broadcast in-register
    # o_ref:  (tb, D)      pooled output
    # m_sc, l_sc: (tb, 1) f32   online-softmax running max / denominator
    # acc_sc:     (tb, D) f32   running weighted sum (numerator)
    sj = pl.program_id(1)

    @pl.when(sj == 0)
    def _init():
        m_sc[...] = jnp.full(m_sc.shape, -jnp.inf, jnp.float32)
        l_sc[...] = jnp.zeros(l_sc.shape, jnp.float32)
        acc_sc[...] = jnp.zeros(acc_sc.shape, jnp.float32)

    xf = x_ref[...].astype(jnp.float32)          # f32 in-register (no-op for f32 x)
    w = w_ref[...]                               # (1, 1, D) f32

    # attention scores for this sequence chunk: VPU multiply + XLU lane-reduce
    # over D (D is the lane axis), f32 accumulation.  No MXU involvement.
    s = jnp.sum(xf * w, axis=-1)                 # (tb, ts) f32

    # online softmax over the sequence axis
    m_prev = m_sc[...]                                               # (tb, 1)
    m_new = jnp.maximum(m_prev, jnp.max(s, axis=-1, keepdims=True))  # (tb, 1)
    alpha = jnp.exp(m_prev - m_new)                                  # (tb, 1)
    p = jnp.exp(s - m_new)                                           # (tb, ts) f32

    l_sc[...] = alpha * l_sc[...] + jnp.sum(p, axis=-1, keepdims=True)

    # weighted partial sum over the chunk: VPU multiply + reduce over the
    # sequence (sublane) axis, entirely in f32 (p is never truncated).
    part = jnp.sum(p[:, :, None] * xf, axis=1)                       # (tb, D) f32
    acc_sc[...] = alpha * acc_sc[...] + part
    m_sc[...] = m_new

    @pl.when(sj == pl.num_programs(1) - 1)
    def _finalize():
        inv_l = pl.reciprocal(l_sc[...], approx=False)   # exact: keeps tight tolerance
        o_ref[...] = (acc_sc[...] * inv_l).astype(o_ref.dtype)


def _tensorcores_per_device():
    """Best-effort TensorCores-per-device (megacore) count; 1 on v5e/v6e."""
    try:
        kind = jax.devices()[0].device_kind.lower()
    except Exception:
        return 1
    return 2 if ("v7" in kind or "v4" in kind) else 1


def _hw_budgets():
    """(target x-tile bytes, scoped VMEM limit) derived from the hardware."""
    try:
        vmem_cap = getattr(pltpu.get_tpu_info(), "vmem_capacity_bytes", None)
    except Exception:
        vmem_cap = None
    if vmem_cap is None:
        return 4 << 20, 48 << 20                      # conservative fallback
    if vmem_cap <= (64 << 20):                        # v7x-class: 64 MiB VMEM, ~3.2 TB/s HBM
        return 8 << 20, min(40 << 20, (vmem_cap * 3) // 4)
    return 6 << 20, 64 << 20                          # v5e/v6e-class: 128 MiB VMEM


def _pick_tiles(N, S, D, itemsize, *, target_bytes, num_cores=1):
    """Choose (tb, ts): tb rows x ts sequence positions per grid step.

    Block-shape rules: ts (second-minor of the x block) and tb (second-minor of
    the output block) must be multiples of the dtype sublane packing (8 for
    f32, 16 for bf16, 32 for 1-byte) or equal the full axis.  Aim for an x tile
    of ~target_bytes; only force >=num_cores row blocks on multi-TC parts.
    """
    sub = max(8, 32 // max(1, itemsize))   # dtype-aware sublane rounding

    # sequence tile: largest legal divisor of S whose minimum (sub-row) slab fits
    seq_cands = sorted({S, *[t for t in range(sub, S + 1, sub) if S % t == 0]},
                       reverse=True)
    ts = seq_cands[-1]
    for t in seq_cands:
        if sub * t * D * itemsize <= target_bytes:
            ts = t
            break

    # row tile: multiple of `sub` dividing N, keeps the tile near budget
    budget_rows = max(sub, target_bytes // max(1, ts * D * itemsize))
    if num_cores > 1:
        # keep >= num_cores row blocks so the "parallel" axis shards evenly
        budget_rows = min(budget_rows, max(sub, N // num_cores))
    row_cands = [t for t in range(sub, N + 1, sub) if N % t == 0 and t <= budget_rows]
    if row_cands:
        tb = max(row_cands)
    else:
        # full-dim escape for the row axis; re-shrink ts so the tile stays sane
        tb = N
        fit = [t for t in seq_cands if tb * t * D * itemsize <= target_bytes]
        ts = max(fit) if fit else seq_cands[-1]
    return tb, ts


def attention_pooling(x, w_mu, b_mu=None, *, target_tile_bytes=None):
    """x: (B, G, S, D); w_mu: (1, D); b_mu: (1,) — unused (softmax over dim=2 is
    shift-invariant w.r.t. a scalar bias, valid because out_features == 1).
    Returns (B, G, D)."""
    del b_mu
    B, G, S, D = x.shape
    N = B * G
    x_flat = x.reshape(N, S, D)

    target, vmem_limit = _hw_budgets()
    if target_tile_bytes is not None:
        target = target_tile_bytes
    num_cores = _tensorcores_per_device()

    tb, ts = _pick_tiles(N, S, D, x.dtype.itemsize,
                         target_bytes=target, num_cores=num_cores)

    # Single resident (1, 1, D) weight block; broadcast happens in-register
    # inside the kernel (constant index map -> DMA'd into VMEM only once).
    w_in = w_mu.astype(jnp.float32).reshape(1, 1, D)

    grid = (N // tb, S // ts)
    out_flat = pl.pallas_call(
        _attn_pool_kernel,
        out_shape=jax.ShapeDtypeStruct((N, D), x.dtype),
        grid_spec=pltpu.PrefetchScalarGridSpec(
            num_scalar_prefetch=0,
            grid=grid,
            in_specs=[
                pl.BlockSpec((tb, ts, D), lambda i, j: (i, j, 0)),   # x row/seq tile
                pl.BlockSpec((1, 1, D), lambda i, j: (0, 0, 0)),     # weights (resident)
            ],
            out_specs=pl.BlockSpec((tb, D), lambda i, j: (i, 0)),
            scratch_shapes=[
                pltpu.VMEM((tb, 1), jnp.float32),   # running max
                pltpu.VMEM((tb, 1), jnp.float32),   # running denominator
                pltpu.VMEM((tb, D), jnp.float32),   # running numerator
            ],
        ),
        compiler_params=pltpu.CompilerParams(
            # rows independent (megacore-shardable); sequence axis carries the
            # online-softmax state -> "arbitrary", placed last.
            dimension_semantics=("parallel", "arbitrary"),
            vmem_limit_bytes=vmem_limit,
        ),
    )(x_flat, w_in)

    return out_flat.reshape(B, G, D)


def _reference(x, w_mu, b_mu):
    # pure-JAX reference mirroring the PyTorch forward (deterministic BBBLinear)
    scores = jnp.einsum("bgsd,od->bgso", x, w_mu,
                        precision=jax.lax.Precision.HIGHEST) + b_mu   # (B, G, S, 1)
    attn = jax.nn.softmax(scores, axis=2)
    return jnp.sum(attn * x, axis=2)                                  # (B, G, D)


if __name__ == "__main__":
    B, G, S, D = 2, 8, 16, 128   # batch, groups, seq_len, d_model (D lane-dense)
    key = jax.random.PRNGKey(0)
    kx, kw, kb = jax.random.split(key, 3)

    x = jax.random.normal(kx, (B, G, S, D), dtype=jnp.float32)
    # deterministic BBBLinear mean parameters (out_features=1)
    w_mu = 0.1 * jax.random.normal(kw, (1, D), dtype=jnp.float32)
    b_mu = 0.1 * jax.random.normal(kb, (1,), dtype=jnp.float32)

    out = attention_pooling(x, w_mu, b_mu)
    out = jax.block_until_ready(out)

    ref = _reference(x, w_mu, b_mu)
    assert out.shape == (B, G, D)
    assert jnp.allclose(out, ref, atol=5e-5, rtol=5e-5), (
        "mismatch vs reference: max abs diff "
        f"{jnp.max(jnp.abs(out - ref))}")

    print("KERNEL_OK")
</pallas_src>

<mosaic_0001>
module attributes {stable_mosaic.version = 11 : i64} {
  func.func @_attn_pool_kernel(%arg0: i32, %arg1: i32, %arg2: memref<16x16x128xf32, #tpu.memory_space<vmem>>, %arg3: memref<1x1x128xf32, #tpu.memory_space<vmem>>, %arg4: memref<16x128xf32, #tpu.memory_space<vmem>>, %arg5: memref<16x1xf32, #tpu.memory_space<vmem>>, %arg6: memref<16x1xf32, #tpu.memory_space<vmem>>, %arg7: memref<16x128xf32, #tpu.memory_space<vmem>>) attributes {dimension_semantics = [#tpu.dimension_semantics<parallel>, #tpu.dimension_semantics<arbitrary>], iteration_bounds = array<i64: 1, 1>, scalar_prefetch = 0 : i64, scratch_operands = 3 : i64, tpu.core_type = #tpu.core_type<tc>, window_params = [{transform_indices = @transform_0, window_bounds = array<i64: 16, 16, 128>}, {pipeline_mode = #tpu.pipeline_mode<synchronous>, transform_indices = @transform_1, window_bounds = array<i64: 1, 1, 128>}, {transform_indices = @transform_2, window_bounds = array<i64: 16, 128>}]} {
    %c0_i32 = arith.constant 0 : i32
    %0 = arith.cmpi eq, %arg1, %c0_i32 : i32
    %1 = arith.extui %0 : i1 to i32
    %c0_i32_0 = arith.constant 0 : i32
    %2 = arith.cmpi ne, %1, %c0_i32_0 : i32
    scf.if %2 {
      %cst_23 = arith.constant 0xFF800000 : f32
      %36 = vector.broadcast %cst_23 : f32 to vector<16x1xf32>
      %c0_24 = arith.constant 0 : index
      %c0_25 = arith.constant 0 : index
      %37 = vector.load %arg5[%c0_24, %c0_25] : memref<16x1xf32, #tpu.memory_space<vmem>>, vector<16x1xf32>
      tpu.vector_store %arg5[%c0_24, %c0_25], %36 {strides = array<i32>} : memref<16x1xf32, #tpu.memory_space<vmem>>, vector<16x1xf32>,
      %cst_26 = arith.constant 0.000000e+00 : f32
      %38 = vector.broadcast %cst_26 : f32 to vector<16x1xf32>
      %c0_27 = arith.constant 0 : index
      %c0_28 = arith.constant 0 : index
      %39 = vector.load %arg6[%c0_27, %c0_28] : memref<16x1xf32, #tpu.memory_space<vmem>>, vector<16x1xf32>
      tpu.vector_store %arg6[%c0_27, %c0_28], %38 {strides = array<i32>} : memref<16x1xf32, #tpu.memory_space<vmem>>, vector<16x1xf32>,
      %cst_29 = arith.constant 0.000000e+00 : f32
      %40 = vector.broadcast %cst_29 : f32 to vector<16x128xf32>
      %c0_30 = arith.constant 0 : index
      %c0_31 = arith.constant 0 : index
      %41 = vector.load %arg7[%c0_30, %c0_31] : memref<16x128xf32, #tpu.memory_space<vmem>>, vector<16x128xf32>
      tpu.vector_store %arg7[%c0_30, %c0_31], %40 {strides = array<i32>} : memref<16x128xf32, #tpu.memory_space<vmem>>, vector<16x128xf32>,
    } else {
    }
    %c0 = arith.constant 0 : index
    %c0_1 = arith.constant 0 : index
    %c0_2 = arith.constant 0 : index
    %3 = vector.load %arg2[%c0, %c0_1, %c0_2] : memref<16x16x128xf32, #tpu.memory_space<vmem>>, vector<16x16x128xf32>
    %c0_3 = arith.constant 0 : index
    %c0_4 = arith.constant 0 : index
    %c0_5 = arith.constant 0 : index
    %4 = vector.load %arg3[%c0_3, %c0_4, %c0_5] : memref<1x1x128xf32, #tpu.memory_space<vmem>>, vector<1x1x128xf32>
    %5 = vector.broadcast %4 : vector<1x1x128xf32> to vector<16x16x128xf32>
    %6 = arith.mulf %3, %5 : vector<16x16x128xf32>
    %cst = arith.constant dense<0.000000e+00> : vector<16x16xf32>
    %7 = vector.multi_reduction <add>, %6, %cst [2] : vector<16x16x128xf32> to vector<16x16xf32>
    %c0_6 = arith.constant 0 : index
    %c0_7 = arith.constant 0 : index
    %8 = vector.load %arg5[%c0_6, %c0_7] : memref<16x1xf32, #tpu.memory_space<vmem>>, vector<16x1xf32>
    %cst_8 = arith.constant dense<0xFF800000> : vector<16xf32>
    %9 = vector.multi_reduction <maximumf>, %7, %cst_8 [1] : vector<16x16xf32> to vector<16xf32>
    %10 = vector.shape_cast %9 : vector<16xf32> to vector<16x1xf32>
    %11 = arith.maximumf %8, %10 : vector<16x1xf32>
    %12 = arith.subf %8, %11 : vector<16x1xf32>
    %13 = math.exp %12 : vector<16x1xf32>
    %14 = vector.broadcast %11 : vector<16x1xf32> to vector<16x16xf32>
    %15 = arith.subf %7, %14 : vector<16x16xf32>
    %16 = math.exp %15 : vector<16x16xf32>
    %c0_9 = arith.constant 0 : index
    %c0_10 = arith.constant 0 : index
    %17 = vector.load %arg6[%c0_9, %c0_10] : memref<16x1xf32, #tpu.memory_space<vmem>>, vector<16x1xf32>
    %18 = arith.mulf %13, %17 : vector<16x1xf32>
    %cst_11 = arith.constant dense<0.000000e+00> : vector<16xf32>
    %19 = vector.multi_reduction <add>, %16, %cst_11 [1] : vector<16x16xf32> to vector<16xf32>
    %20 = vector.shape_cast %19 : vector<16xf32> to vector<16x1xf32>
    %21 = arith.addf %18, %20 : vector<16x1xf32>
    %c0_12 = arith.constant 0 : index
    %c0_13 = arith.constant 0 : index
    %22 = vector.load %arg6[%c0_12, %c0_13] : memref<16x1xf32, #tpu.memory_space<vmem>>, vector<16x1xf32>
    tpu.vector_store %arg6[%c0_12, %c0_13], %21 {strides = array<i32>} : memref<16x1xf32, #tpu.memory_space<vmem>>, vector<16x1xf32>,
    %23 = vector.shape_cast %16 : vector<16x16xf32> to vector<16x16x1xf32>
    %24 = vector.broadcast %23 : vector<16x16x1xf32> to vector<16x16x128xf32>
    %25 = arith.mulf %24, %3 : vector<16x16x128xf32>
    %cst_14 = arith.constant dense<0.000000e+00> : vector<16x128xf32>
    %26 = vector.multi_reduction <add>, %25, %cst_14 [1] : vector<16x16x128xf32> to vector<16x128xf32>
    %c0_15 = arith.constant 0 : index
    %c0_16 = arith.constant 0 : index
    %27 = vector.load %arg7[%c0_15, %c0_16] : memref<16x128xf32, #tpu.memory_space<vmem>>, vector<16x128xf32>
    %28 = vector.broadcast %13 : vector<16x1xf32> to vector<16x128xf32>
    %29 = arith.mulf %28, %27 : vector<16x128xf32>
    %30 = arith.addf %29, %26 : vector<16x128xf32>
    %c0_17 = arith.constant 0 : index
    %c0_18 = arith.constant 0 : index
    %31 = vector.load %arg7[%c0_17, %c0_18] : memref<16x128xf32, #tpu.memory_space<vmem>>, vector<16x128xf32>
    tpu.vector_store %arg7[%c0_17, %c0_18], %30 {strides = array<i32>} : memref<16x128xf32, #tpu.memory_space<vmem>>, vector<16x128xf32>,
    %c0_19 = arith.constant 0 : index
    %c0_20 = arith.constant 0 : index
    %32 = vector.load %arg5[%c0_19, %c0_20] : memref<16x1xf32, #tpu.memory_space<vmem>>, vector<16x1xf32>
    tpu.vector_store %arg5[%c0_19, %c0_20], %11 {strides = array<i32>} : memref<16x1xf32, #tpu.memory_space<vmem>>, vector<16x1xf32>,
    %c0_i32_21 = arith.constant 0 : i32
    %33 = arith.cmpi eq, %arg1, %c0_i32_21 : i32
    %34 = arith.extui %33 : i1 to i32
    %c0_i32_22 = arith.constant 0 : i32
    %35 = arith.cmpi ne, %34, %c0_i32_22 : i32
    scf.if %35 {
      %c0_23 = arith.constant 0 : index
      %c0_24 = arith.constant 0 : index
      %36 = vector.load %arg6[%c0_23, %c0_24] : memref<16x1xf32, #tpu.memory_space<vmem>>, vector<16x1xf32>
      %37 = tpu.reciprocal %36 : vector<16x1xf32> -> vector<16x1xf32>
      %c0_25 = arith.constant 0 : index
      %c0_26 = arith.constant 0 : index
      %38 = vector.load %arg7[%c0_25, %c0_26] : memref<16x128xf32, #tpu.memory_space<vmem>>, vector<16x128xf32>
      %39 = vector.broadcast %37 : vector<16x1xf32> to vector<16x128xf32>
      %40 = arith.mulf %38, %39 : vector<16x128xf32>
      %c0_27 = arith.constant 0 : index
      %c0_28 = arith.constant 0 : index
      %41 = vector.load %arg4[%c0_27, %c0_28] : memref<16x128xf32, #tpu.memory_space<vmem>>, vector<16x128xf32>
      tpu.vector_store %arg4[%c0_27, %c0_28], %40 {strides = array<i32>} : memref<16x128xf32, #tpu.memory_space<vmem>>, vector<16x128xf32>,
    } else {
    }
    return
  }
  func.func @transform_0(%arg0: i32, %arg1: i32) -> (i32, i32, i32) {
    %c0_i32 = arith.constant 0 : i32
    %c0_i32_0 = arith.constant 0 : i32
    return %arg0, %arg1, %c0_i32 : i32, i32, i32
  }
  func.func @transform_1(%arg0: i32, %arg1: i32) -> (i32, i32, i32) {
    %c0_i32 = arith.constant 0 : i32
    %c0_i32_0 = arith.constant 0 : i32
    %c0_i32_1 = arith.constant 0 : i32
    %c0_i32_2 = arith.constant 0 : i32
    return %c0_i32, %c0_i32_0, %c0_i32_1 : i32, i32, i32
  }
  func.func @transform_2(%arg0: i32, %arg1: i32) -> (i32, i32) {
    %c0_i32 = arith.constant 0 : i32
    %c0_i32_0 = arith.constant 0 : i32
    return %arg0, %c0_i32 : i32, i32
  }
}

</mosaic_0001>

<llo_original>
// kernel: tpu_custom_call.1
$region0: #{tpu_custom_call.1}
  #allocation0 [shape = 'u32[]', space=smem, size = 0x4, offset = 0x4, fixed_abs, tag = 'smem constant byte address 0x4 - core index']
  #allocation1 [shape = 'u32[144,128]{1,0:T(1,128)}', space=vmem, size = 0x12000, scoped, tag = 'internal scratch']
  #allocation2 [shape = 'f32[16,1]{1,0:T(8,128)}', space=vmem, size = 0x2000, scoped, tag = 'scratch operand']
  #allocation3 [shape = 'f32[16,1]{1,0:T(8,128)}', space=vmem, size = 0x2000, scoped, tag = 'scratch operand']
  #allocation4 [shape = 'f32[16,128]{1,0:T(8,128)}', space=vmem, size = 0x2000, scoped, tag = 'scratch operand']
  %s0 = inlined_call_operand.hbm [shape: f32[16,16,128], index: 0, kind: input, shape index: {}]
  %s1 = inlined_call_operand.vmem [shape: f32[1,1,128], index: 1, kind: input, shape index: {}]
  %s2 = inlined_call_operand.hbm [shape: f32[16,128], index: 2, kind: output, shape index: {}]
  %s3 = sld [smem:[#allocation0]]
  $region30: #{tpu_custom_call.1} parent=0
    _
  %s5 = ssub.s32 1, %s3
  %s6 = scalar_select 0, %s5, %s3
  $region1: #{tpu_custom_call.1} parent=0
    #allocation5 [shape = 'u8[131072]{0}', space=vmem, size = 0x20000, scoped, tag = 'input window, operand 0, single buffered']
    #allocation6 [shape = 's32[1]{0}', space=sflag, size = 0x4, scoped, tag = 'scoped memory for tpu_custom_call.1']
    #allocation7 [shape = 's32[1]{0}', space=sflag, size = 0x4, scoped, tag = 'scoped memory for tpu_custom_call.1']
    #allocation8 [shape = 'u8[8192]{0}', space=vmem, size = 0x2000, scoped, tag = 'output window, operand 0, single buffered']
    %7 = vsyncpa [#allocation6], 0
    %8 = vsyncpa [#allocation7], 0
    // Predicated region
    $region2: #{tpu_custom_call.1} parent=1 // pred_check
      _
    $region3: #{tpu_custom_call.1} parent=1 // pred_check_branch
      %10 = sbr.rel (0) target = $region5
    $region4: #{tpu_custom_call.1} parent=1 // pred_region
      %s12 = ssub.s32 4096, 4096
      %13 = vsyncadd [#allocation6], %s12
      %s14 = sshll.u32 [#allocation5], 4
      %s15 = int_to_ptr.vmem [resolvable:$true] %s14
      %20 = dma.hbm_to_vmem [thread:$0]  %s0, 4096, %s15, [#allocation6], 128, 128, 8
    $region5: #{tpu_custom_call.1} parent=1 // pred_fallthru
      _
    // Predicated region
    $region6: #{tpu_custom_call.1} parent=1 // pred_check
      _
    $region7: #{tpu_custom_call.1} parent=1 // pred_check_branch
      %22 = sbr.rel (0) target = $region9
    $region8: #{tpu_custom_call.1} parent=1 // pred_region
      _
    $region9: #{tpu_custom_call.1} parent=1 // pred_fallthru
      _
    // Predicated region
    $region10: #{tpu_custom_call.1} parent=1 // pred_check
      _
    $region11: #{tpu_custom_call.1} parent=1 // pred_check_branch
      %24 = sbr.rel (0) target = $region13
    $region12: #{tpu_custom_call.1} parent=1 // pred_region
      %25 = dma.done [#allocation6], 4096
    $region13: #{tpu_custom_call.1} parent=1 // pred_fallthru
      _
    %p26 = scmp.eq.s32.totalorder 0, 0
    // Predicated region
    $region14: #{tpu_custom_call.1} parent=1 // pred_check
      %p27 = pneg %p26
    $region15: #{tpu_custom_call.1} parent=1 // pred_check_branch
      %29 = sbr.rel (%p27) target = $region17
    $region16: #{tpu_custom_call.1} parent=1 // pred_region
      %vm30 = vcmask 7168
      %31 = vst.msk [vmem:[#allocation2] sm:$0xff] %vm30, -inf
      %32 = vst.msk [vmem:[#allocation2 + $0x8] sm:$0xff] %vm30, -inf
      %33 = vst.msk [vmem:[#allocation3] sm:$0xff] %vm30, 0.0
      %34 = vst.msk [vmem:[#allocation3 + $0x8] sm:$0xff] %vm30, 0.0
      %35 = vst [vmem:[#allocation4] sm:$0xff] 0.0
      %36 = vst [vmem:[#allocation4 + $0x8] sm:$0xff] 0.0
    $region17: #{tpu_custom_call.1} parent=1 // pred_fallthru
      _
    %v37 = vld [vmem:[#allocation5] sm:$0xff]
    %v38 = vld [vmem:[#allocation5 + $0x8] sm:$0xff]
    %v39 = vld [vmem:[#allocation5 + $0x10] sm:$0xff]
    %v40 = vld [vmem:[#allocation5 + $0x18] sm:$0xff]
    %v41 = vld [vmem:[#allocation5 + $0x20] sm:$0xff]
    %v42 = vld [vmem:[#allocation5 + $0x28] sm:$0xff]
    %v43 = vld [vmem:[#allocation5 + $0x30] sm:$0xff]
    %v44 = vld [vmem:[#allocation5 + $0x38] sm:$0xff]
    %v45 = vld [vmem:[#allocation5 + $0x40] sm:$0xff]
    %v46 = vld [vmem:[#allocation5 + $0x48] sm:$0xff]
    %v47 = vld [vmem:[#allocation5 + $0x50] sm:$0xff]
    %v48 = vld [vmem:[#allocation5 + $0x58] sm:$0xff]
    %v49 = vld [vmem:[#allocation5 + $0x60] sm:$0xff]
    %v50 = vld [vmem:[#allocation5 + $0x68] sm:$0xff]
    %v51 = vld [vmem:[#allocation5 + $0x70] sm:$0xff]
    %v52 = vld [vmem:[#allocation5 + $0x78] sm:$0xff]
    %v53 = vld [vmem:[#allocation5 + $0x80] sm:$0xff]
    %v54 = vld [vmem:[#allocation5 + $0x88] sm:$0xff]
    %v55 = vld [vmem:[#allocation5 + $0x90] sm:$0xff]
    %v56 = vld [vmem:[#allocation5 + $0x98] sm:$0xff]
    %v57 = vld [vmem:[#allocation5 + $0xa0] sm:$0xff]
    %v58 = vld [vmem:[#allocation5 + $0xa8] sm:$0xff]
    %v59 = vld [vmem:[#allocation5 + $0xb0] sm:$0xff]
    %v60 = vld [vmem:[#allocation5 + $0xb8] sm:$0xff]
    %v61 = vld [vmem:[#allocation5 + $0xc0] sm:$0xff]
    %v62 = vld [vmem:[#allocation5 + $0xc8] sm:$0xff]
    %v63 = vld [vmem:[#allocation5 + $0xd0] sm:$0xff]
    %v64 = vld [vmem:[#allocation5 + $0xd8] sm:$0xff]
    %v65 = vld [vmem:[#allocation5 + $0xe0] sm:$0xff]
    %v66 = vld [vmem:[#allocation5 + $0xe8] sm:$0xff]
    %v67 = vld [vmem:[#allocation5 + $0xf0] sm:$0xff]
    %v68 = vld [vmem:[#allocation5 + $0xf8] sm:$0xff]
    %v69 = vld [vmem:[%s1] sm:$0x1]
    %v71 = vlaneseq
    %v72 = vshrl.u32 %v71, 7
    %v73 = vsub.s32 0, %v72
    %v74 = vrot.slane %v69, %v73
    %v76 = vmul.f32 %v37, %v74
    %v77 = vmul.f32 %v38, %v74
    %v78 = vmul.f32 %v39, %v74
    %v79 = vmul.f32 %v40, %v74
    %v80 = vmul.f32 %v41, %v74
    %v81 = vmul.f32 %v42, %v74
    %v82 = vmul.f32 %v43, %v74
    %v83 = vmul.f32 %v44, %v74
    %v84 = vmul.f32 %v45, %v74
    %v85 = vmul.f32 %v46, %v74
    %v86 = vmul.f32 %v47, %v74
    %v87 = vmul.f32 %v48, %v74
    %v88 = vmul.f32 %v49, %v74
    %v89 = vmul.f32 %v50, %v74
    %v90 = vmul.f32 %v51, %v74
    %v91 = vmul.f32 %v52, %v74
    %v92 = vmul.f32 %v53, %v74
    %v93 = vmul.f32 %v54, %v74
    %v94 = vmul.f32 %v55, %v74
    %v95 = vmul.f32 %v56, %v74
    %v96 = vmul.f32 %v57, %v74
    %v97 = vmul.f32 %v58, %v74
    %v98 = vmul.f32 %v59, %v74
    %v99 = vmul.f32 %v60, %v74
    %v100 = vmul.f32 %v61, %v74
    %v101 = vmul.f32 %v62, %v74
    %v102 = vmul.f32 %v63, %v74
    %v103 = vmul.f32 %v64, %v74
    %v104 = vmul.f32 %v65, %v74
    %v105 = vmul.f32 %v66, %v74
    %v106 = vmul.f32 %v67, %v74
    %v107 = vmul.f32 %v68, %v74
    %108 = vadd.xlane.f32.xlu0 %v76
    %v109 = vpop.xlane.xlu0 %108
    %110 = vadd.xlane.f32.xlu0 %v77
    %v111 = vpop.xlane.xlu0 %110
    %112 = vadd.xlane.f32.xlu0 %v78
    %v113 = vpop.xlane.xlu0 %112
    %114 = vadd.xlane.f32.xlu0 %v79
    %v115 = vpop.xlane.xlu0 %114
    %116 = vadd.xlane.f32.xlu0 %v80
    %v117 = vpop.xlane.xlu0 %116
    %118 = vadd.xlane.f32.xlu0 %v81
    %v119 = vpop.xlane.xlu0 %118
    %120 = vadd.xlane.f32.xlu0 %v82
    %v121 = vpop.xlane.xlu0 %120
    %122 = vadd.xlane.f32.xlu0 %v83
    %v123 = vpop.xlane.xlu0 %122
    %124 = vadd.xlane.f32.xlu0 %v84
    %v125 = vpop.xlane.xlu0 %124
    %126 = vadd.xlane.f32.xlu0 %v85
    %v127 = vpop.xlane.xlu0 %126
    %128 = vadd.xlane.f32.xlu0 %v86
    %v129 = vpop.xlane.xlu0 %128
    %130 = vadd.xlane.f32.xlu0 %v87
    %v131 = vpop.xlane.xlu0 %130
    %132 = vadd.xlane.f32.xlu0 %v88
    %v133 = vpop.xlane.xlu0 %132
    %134 = vadd.xlane.f32.xlu0 %v89
    %v135 = vpop.xlane.xlu0 %134
    %136 = vadd.xlane.f32.xlu0 %v90
    %v137 = vpop.xlane.xlu0 %136
    %138 = vadd.xlane.f32.xlu0 %v91
    %v139 = vpop.xlane.xlu0 %138
    %140 = vadd.xlane.f32.xlu0 %v92
    %v141 = vpop.xlane.xlu0 %140
    %142 = vadd.xlane.f32.xlu0 %v93
    %v143 = vpop.xlane.xlu0 %142
    %144 = vadd.xlane.f32.xlu0 %v94
    %v145 = vpop.xlane.xlu0 %144
    %146 = vadd.xlane.f32.xlu0 %v95
    %v147 = vpop.xlane.xlu0 %146
    %148 = vadd.xlane.f32.xlu0 %v96
    %v149 = vpop.xlane.xlu0 %148
    %150 = vadd.xlane.f32.xlu0 %v97
    %v151 = vpop.xlane.xlu0 %150
    %152 = vadd.xlane.f32.xlu0 %v98
    %v153 = vpop.xlane.xlu0 %152
    %154 = vadd.xlane.f32.xlu0 %v99
    %v155 = vpop.xlane.xlu0 %154
    %156 = vadd.xlane.f32.xlu0 %v100
    %v157 = vpop.xlane.xlu0 %156
    %158 = vadd.xlane.f32.xlu0 %v101
    %v159 = vpop.xlane.xlu0 %158
    %160 = vadd.xlane.f32.xlu0 %v102
    %v161 = vpop.xlane.xlu0 %160
    %162 = vadd.xlane.f32.xlu0 %v103
    %v163 = vpop.xlane.xlu0 %162
    %164 = vadd.xlane.f32.xlu0 %v104
    %v165 = vpop.xlane.xlu0 %164
    %166 = vadd.xlane.f32.xlu0 %v105
    %v167 = vpop.xlane.xlu0 %166
    %168 = vadd.xlane.f32.xlu0 %v106
    %v169 = vpop.xlane.xlu0 %168
    %170 = vadd.xlane.f32.xlu0 %v107
    %v171 = vpop.xlane.xlu0 %170
    %v172 = vld [vmem:[#allocation2] sm:$0xff]
    %v173 = vld [vmem:[#allocation2 + $0x8] sm:$0xff]
    %v206 = vlaneseq
    %v207 = vand.u32 %v206, 127
    %v208 = vlaneseq
    %v209 = vshrl.u32 %v208, 7
    %v210 = vsub.s32 %v207, %v209
    %v211 = vrot.slane %v109, %v210
    %v212 = vadd.s32 %v207, 4294967288
    %v213 = vlaneseq
    %v214 = vshrl.u32 %v213, 7
    %v215 = vsub.s32 %v212, %v214
    %v216 = vrot.slane %v111, %v215
    %vm217 = vcmask 130112
    %v218 = vsel %vm217, %v216, %v211
    %v219 = vlaneseq
    %v220 = vshrl.u32 %v219, 7
    %v221 = vsub.s32 %v207, %v220
    %v222 = vrot.slane %v113, %v221
    %v223 = vlaneseq
    %v224 = vshrl.u32 %v223, 7
    %v225 = vsub.s32 %v212, %v224
    %v226 = vrot.slane %v115, %v225
    %v227 = vsel %vm217, %v226, %v222
    %v228 = vlaneseq
    %v229 = vshrl.u32 %v228, 7
    %v230 = vsub.s32 %v207, %v229
    %v231 = vrot.slane %v117, %v230
    %v232 = vlaneseq
    %v233 = vshrl.u32 %v232, 7
    %v234 = vsub.s32 %v212, %v233
    %v235 = vrot.slane %v119, %v234
    %v236 = vsel %vm217, %v235, %v231
    %v237 = vlaneseq
    %v238 = vshrl.u32 %v237, 7
    %v239 = vsub.s32 %v207, %v238
    %v240 = vrot.slane %v121, %v239
    %v241 = vlaneseq
    %v242 = vshrl.u32 %v241, 7
    %v243 = vsub.s32 %v212, %v242
    %v244 = vrot.slane %v123, %v243
    %v245 = vsel %vm217, %v244, %v240
    %v246 = vlaneseq
    %v247 = vshrl.u32 %v246, 7
    %v248 = vsub.s32 %v207, %v247
    %v249 = vrot.slane %v125, %v248
    %v250 = vlaneseq
    %v251 = vshrl.u32 %v250, 7
    %v252 = vsub.s32 %v212, %v251
    %v253 = vrot.slane %v127, %v252
    %v254 = vsel %vm217, %v253, %v249
    %v255 = vlaneseq
    %v256 = vshrl.u32 %v255, 7
    %v257 = vsub.s32 %v207, %v256
    %v258 = vrot.slane %v129, %v257
    %v259 = vlaneseq
    %v260 = vshrl.u32 %v259, 7
    %v261 = vsub.s32 %v212, %v260
    %v262 = vrot.slane %v131, %v261
    %v263 = vsel %vm217, %v262, %v258
    %v264 = vlaneseq
    %v265 = vshrl.u32 %v264, 7
    %v266 = vsub.s32 %v207, %v265
    %v267 = vrot.slane %v133, %v266
    %v268 = vlaneseq
    %v269 = vshrl.u32 %v268, 7
    %v270 = vsub.s32 %v212, %v269
    %v271 = vrot.slane %v135, %v270
    %v272 = vsel %vm217, %v271, %v267
    %v273 = vlaneseq
    %v274 = vshrl.u32 %v273, 7
    %v275 = vsub.s32 %v207, %v274
    %v276 = vrot.slane %v137, %v275
    %v277 = vlaneseq
    %v278 = vshrl.u32 %v277, 7
    %v279 = vsub.s32 %v212, %v278
    %v280 = vrot.slane %v139, %v279
    %v281 = vsel %vm217, %v280, %v276
    %v282 = vlaneseq
    %v283 = vshrl.u32 %v282, 7
    %v284 = vsub.s32 %v207, %v283
    %v285 = vrot.slane %v141, %v284
    %v286 = vlaneseq
    %v287 = vshrl.u32 %v286, 7
    %v288 = vsub.s32 %v212, %v287
    %v289 = vrot.slane %v143, %v288
    %v290 = vsel %vm217, %v289, %v285
    %v291 = vlaneseq
    %v292 = vshrl.u32 %v291, 7
    %v293 = vsub.s32 %v207, %v292
    %v294 = vrot.slane %v145, %v293
    %v295 = vlaneseq
    %v296 = vshrl.u32 %v295, 7
    %v297 = vsub.s32 %v212, %v296
    %v298 = vrot.slane %v147, %v297
    %v299 = vsel %vm217, %v298, %v294
    %v300 = vlaneseq
    %v301 = vshrl.u32 %v300, 7
    %v302 = vsub.s32 %v207, %v301
    %v303 = vrot.slane %v149, %v302
    %v304 = vlaneseq
    %v305 = vshrl.u32 %v304, 7
    %v306 = vsub.s32 %v212, %v305
    %v307 = vrot.slane %v151, %v306
    %v308 = vsel %vm217, %v307, %v303
    %v309 = vlaneseq
    %v310 = vshrl.u32 %v309, 7
    %v311 = vsub.s32 %v207, %v310
    %v312 = vrot.slane %v153, %v311
    %v313 = vlaneseq
    %v314 = vshrl.u32 %v313, 7
    %v315 = vsub.s32 %v212, %v314
    %v316 = vrot.slane %v155, %v315
    %v317 = vsel %vm217, %v316, %v312
    %v318 = vlaneseq
    %v319 = vshrl.u32 %v318, 7
    %v320 = vsub.s32 %v207, %v319
    %v321 = vrot.slane %v157, %v320
    %v322 = vlaneseq
    %v323 = vshrl.u32 %v322, 7
    %v324 = vsub.s32 %v212, %v323
    %v325 = vrot.slane %v159, %v324
    %v326 = vsel %vm217, %v325, %v321
    %v327 = vlaneseq
    %v328 = vshrl.u32 %v327, 7
    %v329 = vsub.s32 %v207, %v328
    %v330 = vrot.slane %v161, %v329
    %v331 = vlaneseq
    %v332 = vshrl.u32 %v331, 7
    %v333 = vsub.s32 %v212, %v332
    %v334 = vrot.slane %v163, %v333
    %v335 = vsel %vm217, %v334, %v330
    %v336 = vlaneseq
    %v337 = vshrl.u32 %v336, 7
    %v338 = vsub.s32 %v207, %v337
    %v339 = vrot.slane %v165, %v338
    %v340 = vlaneseq
    %v341 = vshrl.u32 %v340, 7
    %v342 = vsub.s32 %v212, %v341
    %v343 = vrot.slane %v167, %v342
    %v344 = vsel %vm217, %v343, %v339
    %v345 = vlaneseq
    %v346 = vshrl.u32 %v345, 7
    %v347 = vsub.s32 %v207, %v346
    %v348 = vrot.slane %v169, %v347
    %v349 = vlaneseq
    %v350 = vshrl.u32 %v349, 7
    %v351 = vsub.s32 %v212, %v350
    %v352 = vrot.slane %v171, %v351
    %v353 = vsel %vm217, %v352, %v348
    %vm354 = vcmask 1041409
    %v355 = vsel %vm354, %v227, %v218
    %vm356 = vcmask 1042434
    %v357 = vsel %vm356, %v236, %v355
    %vm358 = vcmask 1043459
    %v359 = vsel %vm358, %v245, %v357
    %vm360 = vcmask 1044484
    %v361 = vsel %vm360, %v254, %v359
    %vm362 = vcmask 1045509
    %v363 = vsel %vm362, %v263, %v361
    %vm364 = vcmask 1046534
    %v365 = vsel %vm364, %v272, %v363
    %vm366 = vcmask 1047559
    %v367 = vsel %vm366, %v281, %v365
    %v368 = vsel %vm354, %v299, %v290
    %v369 = vsel %vm356, %v308, %v368
    %v370 = vsel %vm358, %v317, %v369
    %v371 = vsel %vm360, %v326, %v370
    %v372 = vsel %vm362, %v335, %v371
    %v373 = vsel %vm364, %v344, %v372
    %v374 = vsel %vm366, %v353, %v373
    %vm377 = vcmask 130048
    %v378 = vsel %vm377, %v367, -inf
    %379 = vmax.xlane.f32.xlu0 %v378
    %v380 = vpop.xlane.xlu0 %379
    %v381 = vsel %vm377, %v374, -inf
    %382 = vmax.xlane.f32.xlu0 %v381
    %v383 = vpop.xlane.xlu0 %382
    %v384 = vmax.f32 %v172, %v380
    %v385 = vmax.f32 %v173, %v383
    %v386 = vsub.f32 %v172, %v384
    %v387 = vsub.f32 %v173, %v385
    %v388 = vmul.f32 %v386, 1.442695
    %v389 = vpow.pop %v388
    %v390 = vmul.f32 %v387, 1.442695
    %v391 = vpow.pop %v390
    %393 = vset.pattern.permute.xlu0 0
    %394 = vperm.xlu0 %393, %v384
    %v395 = vpop.permute.xlu0 %394
    %397 = vset.pattern.permute.xlu0 0
    %398 = vperm.xlu0 %397, %v385
    %v399 = vpop.permute.xlu0 %398
    %v400 = vlaneseq
    %v401 = vshrl.u32 %v400, 7
    %v402 = vsub.s32 0, %v401
    %v403 = vrot.slane %v395, %v402
    %v404 = vlaneseq
    %v405 = vshrl.u32 %v404, 7
    %v406 = vsub.s32 1, %v405
    %v407 = vrot.slane %v395, %v406
    %v408 = vlaneseq
    %v409 = vshrl.u32 %v408, 7
    %v410 = vsub.s32 2, %v409
    %v411 = vrot.slane %v395, %v410
    %v412 = vlaneseq
    %v413 = vshrl.u32 %v412, 7
    %v414 = vsub.s32 3, %v413
    %v415 = vrot.slane %v395, %v414
    %v416 = vlaneseq
    %v417 = vshrl.u32 %v416, 7
    %v418 = vsub.s32 4, %v417
    %v419 = vrot.slane %v395, %v418
    %v420 = vlaneseq
    %v421 = vshrl.u32 %v420, 7
    %v422 = vsub.s32 5, %v421
    %v423 = vrot.slane %v395, %v422
    %v424 = vlaneseq
    %v425 = vshrl.u32 %v424, 7
    %v426 = vsub.s32 6, %v425
    %v427 = vrot.slane %v395, %v426
    %v428 = vlaneseq
    %v429 = vshrl.u32 %v428, 7
    %v430 = vsub.s32 7, %v429
    %v431 = vrot.slane %v395, %v430
    %v432 = vlaneseq
    %v433 = vshrl.u32 %v432, 7
    %v434 = vsub.s32 0, %v433
    %v435 = vrot.slane %v399, %v434
    %v436 = vlaneseq
    %v437 = vshrl.u32 %v436, 7
    %v438 = vsub.s32 1, %v437
    %v439 = vrot.slane %v399, %v438
    %v440 = vlaneseq
    %v441 = vshrl.u32 %v440, 7
    %v442 = vsub.s32 2, %v441
    %v443 = vrot.slane %v399, %v442
    %v444 = vlaneseq
    %v445 = vshrl.u32 %v444, 7
    %v446 = vsub.s32 3, %v445
    %v447 = vrot.slane %v399, %v446
    %v448 = vlaneseq
    %v449 = vshrl.u32 %v448, 7
    %v450 = vsub.s32 4, %v449
    %v451 = vrot.slane %v399, %v450
    %v452 = vlaneseq
    %v453 = vshrl.u32 %v452, 7
    %v454 = vsub.s32 5, %v453
    %v455 = vrot.slane %v399, %v454
    %v456 = vlaneseq
    %v457 = vshrl.u32 %v456, 7
    %v458 = vsub.s32 6, %v457
    %v459 = vrot.slane %v399, %v458
    %v460 = vlaneseq
    %v461 = vshrl.u32 %v460, 7
    %v462 = vsub.s32 7, %v461
    %v463 = vrot.slane %v399, %v462
    %v480 = vsub.f32 %v109, %v403
    %v481 = vsub.f32 %v111, %v403
    %v482 = vsub.f32 %v113, %v407
    %v483 = vsub.f32 %v115, %v407
    %v484 = vsub.f32 %v117, %v411
    %v485 = vsub.f32 %v119, %v411
    %v486 = vsub.f32 %v121, %v415
    %v487 = vsub.f32 %v123, %v415
    %v488 = vsub.f32 %v125, %v419
    %v489 = vsub.f32 %v127, %v419
    %v490 = vsub.f32 %v129, %v423
    %v491 = vsub.f32 %v131, %v423
    %v492 = vsub.f32 %v133, %v427
    %v493 = vsub.f32 %v135, %v427
    %v494 = vsub.f32 %v137, %v431
    %v495 = vsub.f32 %v139, %v431
    %v496 = vsub.f32 %v141, %v435
    %v497 = vsub.f32 %v143, %v435
    %v498 = vsub.f32 %v145, %v439
    %v499 = vsub.f32 %v147, %v439
    %v500 = vsub.f32 %v149, %v443
    %v501 = vsub.f32 %v151, %v443
    %v502 = vsub.f32 %v153, %v447
    %v503 = vsub.f32 %v155, %v447
    %v504 = vsub.f32 %v157, %v451
    %v505 = vsub.f32 %v159, %v451
    %v506 = vsub.f32 %v161, %v455
    %v507 = vsub.f32 %v163, %v455
    %v508 = vsub.f32 %v165, %v459
    %v509 = vsub.f32 %v167, %v459
    %v510 = vsub.f32 %v169, %v463
    %v511 = vsub.f32 %v171, %v463
    %v512 = vmul.f32 %v480, 1.442695
    %v513 = vpow.pop %v512
    %v514 = vmul.f32 %v481, 1.442695
    %v515 = vpow.pop %v514
    %v516 = vmul.f32 %v482, 1.442695
    %v517 = vpow.pop %v516
    %v518 = vmul.f32 %v483, 1.442695
    %v519 = vpow.pop %v518
    %v520 = vmul.f32 %v484, 1.442695
    %v521 = vpow.pop %v520
    %v522 = vmul.f32 %v485, 1.442695
    %v523 = vpow.pop %v522
    %v524 = vmul.f32 %v486, 1.442695
    %v525 = vpow.pop %v524
    %v526 = vmul.f32 %v487, 1.442695
    %v527 = vpow.pop %v526
    %v528 = vmul.f32 %v488, 1.442695
    %v529 = vpow.pop %v528
    %v530 = vmul.f32 %v489, 1.442695
    %v531 = vpow.pop %v530
    %v532 = vmul.f32 %v490, 1.442695
    %v533 = vpow.pop %v532
    %v534 = vmul.f32 %v491, 1.442695
    %v535 = vpow.pop %v534
    %v536 = vmul.f32 %v492, 1.442695
    %v537 = vpow.pop %v536
    %v538 = vmul.f32 %v493, 1.442695
    %v539 = vpow.pop %v538
    %v540 = vmul.f32 %v494, 1.442695
    %v541 = vpow.pop %v540
    %v542 = vmul.f32 %v495, 1.442695
    %v543 = vpow.pop %v542
    %v544 = vmul.f32 %v496, 1.442695
    %v545 = vpow.pop %v544
    %v546 = vmul.f32 %v497, 1.442695
    %v547 = vpow.pop %v546
    %v548 = vmul.f32 %v498, 1.442695
    %v549 = vpow.pop %v548
    %v550 = vmul.f32 %v499, 1.442695
    %v551 = vpow.pop %v550
    %v552 = vmul.f32 %v500, 1.442695
    %v553 = vpow.pop %v552
    %v554 = vmul.f32 %v501, 1.442695
    %v555 = vpow.pop %v554
    %v556 = vmul.f32 %v502, 1.442695
    %v557 = vpow.pop %v556
    %v558 = vmul.f32 %v503, 1.442695
    %v559 = vpow.pop %v558
    %v560 = vmul.f32 %v504, 1.442695
    %v561 = vpow.pop %v560
    %v562 = vmul.f32 %v505, 1.442695
    %v563 = vpow.pop %v562
    %v564 = vmul.f32 %v506, 1.442695
    %v565 = vpow.pop %v564
    %v566 = vmul.f32 %v507, 1.442695
    %v567 = vpow.pop %v566
    %v568 = vmul.f32 %v508, 1.442695
    %v569 = vpow.pop %v568
    %v570 = vmul.f32 %v509, 1.442695
    %v571 = vpow.pop %v570
    %v572 = vmul.f32 %v510, 1.442695
    %v573 = vpow.pop %v572
    %v574 = vmul.f32 %v511, 1.442695
    %v575 = vpow.pop %v574
    %v576 = vld [vmem:[#allocation3] sm:$0xff]
    %v577 = vld [vmem:[#allocation3 + $0x8] sm:$0xff]
    %v578 = vmul.f32 %v389, %v576
    %v579 = vmul.f32 %v391, %v577
    %612 = vset.pattern.permute.xlu0 0
    %613 = vperm.xlu0 %612, %v513
    %v614 = vpop.permute.xlu0 %613
    %615 = vset.pattern.permute.xlu0 0
    %616 = vperm.xlu0 %615, %v515
    %v617 = vpop.permute.xlu0 %616
    %618 = vset.pattern.permute.xlu0 0
    %619 = vperm.xlu0 %618, %v517
    %v620 = vpop.permute.xlu0 %619
    %621 = vset.pattern.permute.xlu0 0
    %622 = vperm.xlu0 %621, %v519
    %v623 = vpop.permute.xlu0 %622
    %624 = vset.pattern.permute.xlu0 0
    %625 = vperm.xlu0 %624, %v521
    %v626 = vpop.permute.xlu0 %625
    %627 = vset.pattern.permute.xlu0 0
    %628 = vperm.xlu0 %627, %v523
    %v629 = vpop.permute.xlu0 %628
    %630 = vset.pattern.permute.xlu0 0
    %631 = vperm.xlu0 %630, %v525
    %v632 = vpop.permute.xlu0 %631
    %633 = vset.pattern.permute.xlu0 0
    %634 = vperm.xlu0 %633, %v527
    %v635 = vpop.permute.xlu0 %634
    %636 = vset.pattern.permute.xlu0 0
    %637 = vperm.xlu0 %636, %v529
    %v638 = vpop.permute.xlu0 %637
    %639 = vset.pattern.permute.xlu0 0
    %640 = vperm.xlu0 %639, %v531
    %v641 = vpop.permute.xlu0 %640
    %642 = vset.pattern.permute.xlu0 0
    %643 = vperm.xlu0 %642, %v533
    %v644 = vpop.permute.xlu0 %643
    %645 = vset.pattern.permute.xlu0 0
    %646 = vperm.xlu0 %645, %v535
    %v647 = vpop.permute.xlu0 %646
    %648 = vset.pattern.permute.xlu0 0
    %649 = vperm.xlu0 %648, %v537
    %v650 = vpop.permute.xlu0 %649
    %651 = vset.pattern.permute.xlu0 0
    %652 = vperm.xlu0 %651, %v539
    %v653 = vpop.permute.xlu0 %652
    %654 = vset.pattern.permute.xlu0 0
    %655 = vperm.xlu0 %654, %v541
    %v656 = vpop.permute.xlu0 %655
    %657 = vset.pattern.permute.xlu0 0
    %658 = vperm.xlu0 %657, %v543
    %v659 = vpop.permute.xlu0 %658
    %660 = vset.pattern.permute.xlu0 0
    %661 = vperm.xlu0 %660, %v545
    %v662 = vpop.permute.xlu0 %661
    %663 = vset.pattern.permute.xlu0 0
    %664 = vperm.xlu0 %663, %v547
    %v665 = vpop.permute.xlu0 %664
    %666 = vset.pattern.permute.xlu0 0
    %667 = vperm.xlu0 %666, %v549
    %v668 = vpop.permute.xlu0 %667
    %669 = vset.pattern.permute.xlu0 0
    %670 = vperm.xlu0 %669, %v551
    %v671 = vpop.permute.xlu0 %670
    %672 = vset.pattern.permute.xlu0 0
    %673 = vperm.xlu0 %672, %v553
    %v674 = vpop.permute.xlu0 %673
    %675 = vset.pattern.permute.xlu0 0
    %676 = vperm.xlu0 %675, %v555
    %v677 = vpop.permute.xlu0 %676
    %678 = vset.pattern.permute.xlu0 0
    %679 = vperm.xlu0 %678, %v557
    %v680 = vpop.permute.xlu0 %679
    %681 = vset.pattern.permute.xlu0 0
    %682 = vperm.xlu0 %681, %v559
    %v683 = vpop.permute.xlu0 %682
    %684 = vset.pattern.permute.xlu0 0
    %685 = vperm.xlu0 %684, %v561
    %v686 = vpop.permute.xlu0 %685
    %687 = vset.pattern.permute.xlu0 0
    %688 = vperm.xlu0 %687, %v563
    %v689 = vpop.permute.xlu0 %688
    %690 = vset.pattern.permute.xlu0 0
    %691 = vperm.xlu0 %690, %v565
    %v692 = vpop.permute.xlu0 %691
    %693 = vset.pattern.permute.xlu0 0
    %694 = vperm.xlu0 %693, %v567
    %v695 = vpop.permute.xlu0 %694
    %696 = vset.pattern.permute.xlu0 0
    %697 = vperm.xlu0 %696, %v569
    %v698 = vpop.permute.xlu0 %697
    %699 = vset.pattern.permute.xlu0 0
    %700 = vperm.xlu0 %699, %v571
    %v701 = vpop.permute.xlu0 %700
    %702 = vset.pattern.permute.xlu0 0
    %703 = vperm.xlu0 %702, %v573
    %v704 = vpop.permute.xlu0 %703
    %705 = vset.pattern.permute.xlu0 0
    %706 = vperm.xlu0 %705, %v575
    %v707 = vpop.permute.xlu0 %706
    %v708 = vlaneseq
    %v709 = vshrl.u32 %v708, 7
    %v710 = vsub.s32 %v207, %v709
    %v711 = vrot.slane %v614, %v710
    %v712 = vlaneseq
    %v713 = vshrl.u32 %v712, 7
    %v714 = vsub.s32 %v212, %v713
    %v715 = vrot.slane %v617, %v714
    %v716 = vsel %vm217, %v715, %v711
    %v717 = vlaneseq
    %v718 = vshrl.u32 %v717, 7
    %v719 = vsub.s32 %v207, %v718
    %v720 = vrot.slane %v620, %v719
    %v721 = vlaneseq
    %v722 = vshrl.u32 %v721, 7
    %v723 = vsub.s32 %v212, %v722
    %v724 = vrot.slane %v623, %v723
    %v725 = vsel %vm217, %v724, %v720
    %v726 = vlaneseq
    %v727 = vshrl.u32 %v726, 7
    %v728 = vsub.s32 %v207, %v727
    %v729 = vrot.slane %v626, %v728
    %v730 = vlaneseq
    %v731 = vshrl.u32 %v730, 7
    %v732 = vsub.s32 %v212, %v731
    %v733 = vrot.slane %v629, %v732
    %v734 = vsel %vm217, %v733, %v729
    %v735 = vlaneseq
    %v736 = vshrl.u32 %v735, 7
    %v737 = vsub.s32 %v207, %v736
    %v738 = vrot.slane %v632, %v737
    %v739 = vlaneseq
    %v740 = vshrl.u32 %v739, 7
    %v741 = vsub.s32 %v212, %v740
    %v742 = vrot.slane %v635, %v741
    %v743 = vsel %vm217, %v742, %v738
    %v744 = vlaneseq
    %v745 = vshrl.u32 %v744, 7
    %v746 = vsub.s32 %v207, %v745
    %v747 = vrot.slane %v638, %v746
    %v748 = vlaneseq
    %v749 = vshrl.u32 %v748, 7
    %v750 = vsub.s32 %v212, %v749
    %v751 = vrot.slane %v641, %v750
    %v752 = vsel %vm217, %v751, %v747
    %v753 = vlaneseq
    %v754 = vshrl.u32 %v753, 7
    %v755 = vsub.s32 %v207, %v754
    %v756 = vrot.slane %v644, %v755
    %v757 = vlaneseq
    %v758 = vshrl.u32 %v757, 7
    %v759 = vsub.s32 %v212, %v758
    %v760 = vrot.slane %v647, %v759
    %v761 = vsel %vm217, %v760, %v756
    %v762 = vlaneseq
    %v763 = vshrl.u32 %v762, 7
    %v764 = vsub.s32 %v207, %v763
    %v765 = vrot.slane %v650, %v764
    %v766 = vlaneseq
    %v767 = vshrl.u32 %v766, 7
    %v768 = vsub.s32 %v212, %v767
    %v769 = vrot.slane %v653, %v768
    %v770 = vsel %vm217, %v769, %v765
    %v771 = vlaneseq
    %v772 = vshrl.u32 %v771, 7
    %v773 = vsub.s32 %v207, %v772
    %v774 = vrot.slane %v656, %v773
    %v775 = vlaneseq
    %v776 = vshrl.u32 %v775, 7
    %v777 = vsub.s32 %v212, %v776
    %v778 = vrot.slane %v659, %v777
    %v779 = vsel %vm217, %v778, %v774
    %v780 = vlaneseq
    %v781 = vshrl.u32 %v780, 7
    %v782 = vsub.s32 %v207, %v781
    %v783 = vrot.slane %v662, %v782
    %v784 = vlaneseq
    %v785 = vshrl.u32 %v784, 7
    %v786 = vsub.s32 %v212, %v785
    %v787 = vrot.slane %v665, %v786
    %v788 = vsel %vm217, %v787, %v783
    %v789 = vlaneseq
    %v790 = vshrl.u32 %v789, 7
    %v791 = vsub.s32 %v207, %v790
    %v792 = vrot.slane %v668, %v791
    %v793 = vlaneseq
    %v794 = vshrl.u32 %v793, 7
    %v795 = vsub.s32 %v212, %v794
    %v796 = vrot.slane %v671, %v795
    %v797 = vsel %vm217, %v796, %v792
    %v798 = vlaneseq
    %v799 = vshrl.u32 %v798, 7
    %v800 = vsub.s32 %v207, %v799
    %v801 = vrot.slane %v674, %v800
    %v802 = vlaneseq
    %v803 = vshrl.u32 %v802, 7
    %v804 = vsub.s32 %v212, %v803
    %v805 = vrot.slane %v677, %v804
    %v806 = vsel %vm217, %v805, %v801
    %v807 = vlaneseq
    %v808 = vshrl.u32 %v807, 7
    %v809 = vsub.s32 %v207, %v808
    %v810 = vrot.slane %v680, %v809
    %v811 = vlaneseq
    %v812 = vshrl.u32 %v811, 7
    %v813 = vsub.s32 %v212, %v812
    %v814 = vrot.slane %v683, %v813
    %v815 = vsel %vm217, %v814, %v810
    %v816 = vlaneseq
    %v817 = vshrl.u32 %v816, 7
    %v818 = vsub.s32 %v207, %v817
    %v819 = vrot.slane %v686, %v818
    %v820 = vlaneseq
    %v821 = vshrl.u32 %v820, 7
    %v822 = vsub.s32 %v212, %v821
    %v823 = vrot.slane %v689, %v822
    %v824 = vsel %vm217, %v823, %v819
    %v825 = vlaneseq
    %v826 = vshrl.u32 %v825, 7
    %v827 = vsub.s32 %v207, %v826
    %v828 = vrot.slane %v692, %v827
    %v829 = vlaneseq
    %v830 = vshrl.u32 %v829, 7
    %v831 = vsub.s32 %v212, %v830
    %v832 = vrot.slane %v695, %v831
    %v833 = vsel %vm217, %v832, %v828
    %v834 = vlaneseq
    %v835 = vshrl.u32 %v834, 7
    %v836 = vsub.s32 %v207, %v835
    %v837 = vrot.slane %v698, %v836
    %v838 = vlaneseq
    %v839 = vshrl.u32 %v838, 7
    %v840 = vsub.s32 %v212, %v839
    %v841 = vrot.slane %v701, %v840
    %v842 = vsel %vm217, %v841, %v837
    %v843 = vlaneseq
    %v844 = vshrl.u32 %v843, 7
    %v845 = vsub.s32 %v207, %v844
    %v846 = vrot.slane %v704, %v845
    %v847 = vlaneseq
    %v848 = vshrl.u32 %v847, 7
    %v849 = vsub.s32 %v212, %v848
    %v850 = vrot.slane %v707, %v849
    %v851 = vsel %vm217, %v850, %v846
    %v852 = vsel %vm354, %v725, %v716
    %v853 = vsel %vm356, %v734, %v852
    %v854 = vsel %vm358, %v743, %v853
    %v855 = vsel %vm360, %v752, %v854
    %v856 = vsel %vm362, %v761, %v855
    %v857 = vsel %vm364, %v770, %v856
    %v858 = vsel %vm366, %v779, %v857
    %v859 = vsel %vm354, %v797, %v788
    %v860 = vsel %vm356, %v806, %v859
    %v861 = vsel %vm358, %v815, %v860
    %v862 = vsel %vm360, %v824, %v861
    %v863 = vsel %vm362, %v833, %v862
    %v864 = vsel %vm364, %v842, %v863
    %v865 = vsel %vm366, %v851, %v864
    %v868 = vsel %vm377, %v858, 0.0
    %869 = vadd.xlane.f32.xlu0 %v868
    %v870 = vpop.xlane.xlu0 %869
    %v871 = vsel %vm377, %v865, 0.0
    %872 = vadd.xlane.f32.xlu0 %v871
    %v873 = vpop.xlane.xlu0 %872
    %v874 = vadd.f32 %v578, %v870
    %v875 = vadd.f32 %v579, %v873
    %vm876 = vcmask 7168
    %877 = vst.msk [vmem:[#allocation3] sm:$0xff] %vm876, %v874
    %878 = vst.msk [vmem:[#allocation3 + $0x8] sm:$0xff] %vm876, %v875
    %v911 = vmul.f32 %v614, %v37
    %v912 = vmul.f32 %v617, %v38
    %v913 = vmul.f32 %v620, %v39
    %v914 = vmul.f32 %v623, %v40
    %v915 = vmul.f32 %v626, %v41
    %v916 = vmul.f32 %v629, %v42
    %v917 = vmul.f32 %v632, %v43
    %v918 = vmul.f32 %v635, %v44
    %v919 = vmul.f32 %v638, %v45
    %v920 = vmul.f32 %v641, %v46
    %v921 = vmul.f32 %v644, %v47
    %v922 = vmul.f32 %v647, %v48
    %v923 = vmul.f32 %v650, %v49
    %v924 = vmul.f32 %v653, %v50
    %v925 = vmul.f32 %v656, %v51
    %v926 = vmul.f32 %v659, %v52
    %v927 = vmul.f32 %v662, %v53
    %v928 = vmul.f32 %v665, %v54
    %v929 = vmul.f32 %v668, %v55
    %v930 = vmul.f32 %v671, %v56
    %v931 = vmul.f32 %v674, %v57
    %v932 = vmul.f32 %v677, %v58
    %v933 = vmul.f32 %v680, %v59
    %v934 = vmul.f32 %v683, %v60
    %v935 = vmul.f32 %v686, %v61
    %v936 = vmul.f32 %v689, %v62
    %v937 = vmul.f32 %v692, %v63
    %v938 = vmul.f32 %v695, %v64
    %v939 = vmul.f32 %v698, %v65
    %v940 = vmul.f32 %v701, %v66
    %v941 = vmul.f32 %v704, %v67
    %v942 = vmul.f32 %v707, %v68
    %v943 = vadd.f32 %v911, %v912
    %v944 = vrot.slane %v943, 4
    %v945 = vadd.f32 %v943, %v944
    %v946 = vrot.slane %v945, 2
    %v947 = vadd.f32 %v945, %v946
    %v948 = vrot.slane %v947, 1
    %v949 = vadd.f32 %v947, %v948
    %v950 = vadd.f32 %v913, %v914
    %v951 = vrot.slane %v950, 4
    %v952 = vadd.f32 %v950, %v951
    %v953 = vrot.slane %v952, 2
    %v954 = vadd.f32 %v952, %v953
    %v955 = vrot.slane %v954, 1
    %v956 = vadd.f32 %v954, %v955
    %v957 = vadd.f32 %v915, %v916
    %v958 = vrot.slane %v957, 4
    %v959 = vadd.f32 %v957, %v958
    %v960 = vrot.slane %v959, 2
    %v961 = vadd.f32 %v959, %v960
    %v962 = vrot.slane %v961, 1
    %v963 = vadd.f32 %v961, %v962
    %v964 = vadd.f32 %v917, %v918
    %v965 = vrot.slane %v964, 4
    %v966 = vadd.f32 %v964, %v965
    %v967 = vrot.slane %v966, 2
    %v968 = vadd.f32 %v966, %v967
    %v969 = vrot.slane %v968, 1
    %v970 = vadd.f32 %v968, %v969
    %v971 = vadd.f32 %v919, %v920
    %v972 = vrot.slane %v971, 4
    %v973 = vadd.f32 %v971, %v972
    %v974 = vrot.slane %v973, 2
    %v975 = vadd.f32 %v973, %v974
    %v976 = vrot.slane %v975, 1
    %v977 = vadd.f32 %v975, %v976
    %v978 = vadd.f32 %v921, %v922
    %v979 = vrot.slane %v978, 4
    %v980 = vadd.f32 %v978, %v979
    %v981 = vrot.slane %v980, 2
    %v982 = vadd.f32 %v980, %v981
    %v983 = vrot.slane %v982, 1
    %v984 = vadd.f32 %v982, %v983
    %v985 = vadd.f32 %v923, %v924
    %v986 = vrot.slane %v985, 4
    %v987 = vadd.f32 %v985, %v986
    %v988 = vrot.slane %v987, 2
    %v989 = vadd.f32 %v987, %v988
    %v990 = vrot.slane %v989, 1
    %v991 = vadd.f32 %v989, %v990
    %v992 = vadd.f32 %v925, %v926
    %v993 = vrot.slane %v992, 4
    %v994 = vadd.f32 %v992, %v993
    %v995 = vrot.slane %v994, 2
    %v996 = vadd.f32 %v994, %v995
    %v997 = vrot.slane %v996, 1
    %v998 = vadd.f32 %v996, %v997
    %v999 = vadd.f32 %v927, %v928
    %v1000 = vrot.slane %v999, 4
    %v1001 = vadd.f32 %v999, %v1000
    %v1002 = vrot.slane %v1001, 2
    %v1003 = vadd.f32 %v1001, %v1002
    %v1004 = vrot.slane %v1003, 1
    %v1005 = vadd.f32 %v1003, %v1004
    %v1006 = vadd.f32 %v929, %v930
    %v1007 = vrot.slane %v1006, 4
    %v1008 = vadd.f32 %v1006, %v1007
    %v1009 = vrot.slane %v1008, 2
    %v1010 = vadd.f32 %v1008, %v1009
    %v1011 = vrot.slane %v1010, 1
    %v1012 = vadd.f32 %v1010, %v1011
    %v1013 = vadd.f32 %v931, %v932
    %v1014 = vrot.slane %v1013, 4
    %v1015 = vadd.f32 %v1013, %v1014
    %v1016 = vrot.slane %v1015, 2
    %v1017 = vadd.f32 %v1015, %v1016
    %v1018 = vrot.slane %v1017, 1
    %v1019 = vadd.f32 %v1017, %v1018
    %v1020 = vadd.f32 %v933, %v934
    %v1021 = vrot.slane %v1020, 4
    %v1022 = vadd.f32 %v1020, %v1021
    %v1023 = vrot.slane %v1022, 2
    %v1024 = vadd.f32 %v1022, %v1023
    %v1025 = vrot.slane %v1024, 1
    %v1026 = vadd.f32 %v1024, %v1025
    %v1027 = vadd.f32 %v935, %v936
    %v1028 = vrot.slane %v1027, 4
    %v1029 = vadd.f32 %v1027, %v1028
    %v1030 = vrot.slane %v1029, 2
    %v1031 = vadd.f32 %v1029, %v1030
    %v1032 = vrot.slane %v1031, 1
    %v1033 = vadd.f32 %v1031, %v1032
    %v1034 = vadd.f32 %v937, %v938
    %v1035 = vrot.slane %v1034, 4
    %v1036 = vadd.f32 %v1034, %v1035
    %v1037 = vrot.slane %v1036, 2
    %v1038 = vadd.f32 %v1036, %v1037
    %v1039 = vrot.slane %v1038, 1
    %v1040 = vadd.f32 %v1038, %v1039
    %v1041 = vadd.f32 %v939, %v940
    %v1042 = vrot.slane %v1041, 4
    %v1043 = vadd.f32 %v1041, %v1042
    %v1044 = vrot.slane %v1043, 2
    %v1045 = vadd.f32 %v1043, %v1044
    %v1046 = vrot.slane %v1045, 1
    %v1047 = vadd.f32 %v1045, %v1046
    %v1048 = vadd.f32 %v941, %v942
    %v1049 = vrot.slane %v1048, 4
    %v1050 = vadd.f32 %v1048, %v1049
    %v1051 = vrot.slane %v1050, 2
    %v1052 = vadd.f32 %v1050, %v1051
    %v1053 = vrot.slane %v1052, 1
    %v1054 = vadd.f32 %v1052, %v1053
    %v1055 = vld [vmem:[#allocation4] sm:$0xff]
    %v1056 = vld [vmem:[#allocation4 + $0x8] sm:$0xff]
    %1058 = vset.pattern.permute.xlu0 0
    %1059 = vperm.xlu0 %1058, %v389
    %v1060 = vpop.permute.xlu0 %1059
    %1063 = vset.pattern.permute.xlu0 0
    %1064 = vperm.xlu0 %1063, %v391
    %v1065 = vpop.permute.xlu0 %1064
    %v1067 = vmul.f32 %v1060, %v1055
    %v1068 = vmul.f32 %v1065, %v1056
    %v1085 = vsel %vm354, %v956, %v949
    %v1086 = vsel %vm356, %v963, %v1085
    %v1087 = vsel %vm358, %v970, %v1086
    %v1088 = vsel %vm360, %v977, %v1087
    %v1089 = vsel %vm362, %v984, %v1088
    %v1090 = vsel %vm364, %v991, %v1089
    %v1091 = vsel %vm366, %v998, %v1090
    %v1092 = vsel %vm354, %v1012, %v1005
    %v1093 = vsel %vm356, %v1019, %v1092
    %v1094 = vsel %vm358, %v1026, %v1093
    %v1095 = vsel %vm360, %v1033, %v1094
    %v1096 = vsel %vm362, %v1040, %v1095
    %v1097 = vsel %vm364, %v1047, %v1096
    %v1098 = vsel %vm366, %v1054, %v1097
    %v1101 = vadd.f32 %v1067, %v1091
    %v1102 = vadd.f32 %v1068, %v1098
    %1103 = vst [vmem:[#allocation4] sm:$0xff] %v1101
    %1104 = vst [vmem:[#allocation4 + $0x8] sm:$0xff] %v1102
    %1105 = vst.msk [vmem:[#allocation2] sm:$0xff] %vm876, %v384
    %1106 = vst.msk [vmem:[#allocation2 + $0x8] sm:$0xff] %vm876, %v385
    // Predicated region
    $region18: #{tpu_custom_call.1} parent=1 // pred_check
      %p1107 = pneg %p26
    $region19: #{tpu_custom_call.1} parent=1 // pred_check_branch
      %1109 = sbr.rel (%p1107) target = $region21
    $region20: #{tpu_custom_call.1} parent=1 // pred_region
      %v1110 = vld [vmem:[#allocation3] sm:$0xff]
      %v1111 = vld [vmem:[#allocation3 + $0x8] sm:$0xff]
      %v1112 = vrcp.pop %v1110
      %v1113 = vrcp.pop %v1111
      %v1114 = vld [vmem:[#allocation4] sm:$0xff]
      %v1115 = vld [vmem:[#allocation4 + $0x8] sm:$0xff]
      %1117 = vset.pattern.permute.xlu0 0
      %1118 = vperm.xlu0 %1117, %v1112
      %v1119 = vpop.permute.xlu0 %1118
      %1122 = vset.pattern.permute.xlu0 0
      %1123 = vperm.xlu0 %1122, %v1113
      %v1124 = vpop.permute.xlu0 %1123
      %v1126 = vmul.f32 %v1114, %v1119
      %v1127 = vmul.f32 %v1115, %v1124
      %1128 = vst [vmem:[#allocation8] sm:$0xff] %v1126
      %1129 = vst [vmem:[#allocation8 + $0x8] sm:$0xff] %v1127
    $region21: #{tpu_custom_call.1} parent=1 // pred_fallthru
      _
    // Predicated region
    $region22: #{tpu_custom_call.1} parent=1 // pred_check
      _
    $region23: #{tpu_custom_call.1} parent=1 // pred_check_branch
      %1131 = sbr.rel (0) target = $region25
    $region24: #{tpu_custom_call.1} parent=1 // pred_region
      %s1133 = ssub.s32 256, 256
      %1134 = vsyncadd [#allocation7], %s1133
      %s1135 = sshll.u32 [#allocation8], 4
      %s1136 = int_to_ptr.vmem [resolvable:$true] %s1135
      %1141 = dma.vmem_to_hbm [thread:$0]  %s1136, 256, %s2, [#allocation7], 128, 128, 8
    $region25: #{tpu_custom_call.1} parent=1 // pred_fallthru
      _
    // Predicated region
    $region26: #{tpu_custom_call.1} parent=1 // pred_check
      _
    $region27: #{tpu_custom_call.1} parent=1 // pred_check_branch
      %1143 = sbr.rel (0) target = $region29
    $region28: #{tpu_custom_call.1} parent=1 // pred_region
      %1144 = dma.done [#allocation7], 256
    $region29: #{tpu_custom_call.1} parent=1 // pred_fallthru
      _
    %1145 = vsyncpa [#allocation6], 1
    %1146 = vsyncpa [#allocation7], 1

</llo_original>
